<compile_context>
chip_gen: v6e
topology: v6e:2x2x1
jax: 0.10.0
libtpu: 0.0.40
codegen_flags: <defaults>
</compile_context>

<pallas_src>
import numpy as np
import jax
import jax.numpy as jnp
from jax.experimental import pallas as pl
from jax.experimental.pallas import tpu as pltpu


def _make_kernel(weight_list):
    """Build the kernel with the per-class weights baked in as constants."""
    weights = [float(w) for w in weight_list]
    num_classes = len(weights)

    def kernel(logs_ref, lab_ref, out_ref):
        # logs_ref: (1, C, R, 128) native dtype (bf16/f32)
        # lab_ref : (1, R, 128)    int8 (or int32); value C == sentinel (mask/pad)
        # out_ref : (1, 1, R, 128) f32 accumulator, resident across grid axis 2

        @pl.when(pl.program_id(2) == 0)
        def _():
            out_ref[...] = jnp.zeros_like(out_ref)

        lab = lab_ref[0].astype(jnp.int32)                      # (R, 128)

        # Pass 1: running max over the class axis, streamed one (R,128) class
        # slice at a time (class axis is a major axis -> pure VPU work, no
        # (C,R,128) f32 temporary is materialized).
        m = logs_ref[0, 0].astype(jnp.float32)
        for c in range(1, num_classes):
            m = jnp.maximum(m, logs_ref[0, c].astype(jnp.float32))

        # Pass 2: exp-sum plus target-logit / target-weight gather via a select
        # chain over the (static, small) class count.
        s = jnp.zeros_like(m)
        logit_y = jnp.zeros_like(m)   # stays 0 (finite) for sentinel labels
        w_y = jnp.zeros_like(m)       # stays 0 for sentinel labels / padding
        for c in range(num_classes):
            x = logs_ref[0, c].astype(jnp.float32)
            s = s + jnp.exp(x - m)
            sel = lab == c
            logit_y = jnp.where(sel, x, logit_y)
            w_y = jnp.where(sel, jnp.float32(weights[c]), w_y)

        lse = jnp.log(s) + m
        # Per-pixel weighted CE accumulated into the lane-dense resident slab.
        out_ref[0, 0] = out_ref[0, 0] + w_y * (lse - logit_y)

    return kernel


def _vmem_budget_bytes():
    """Per-step VMEM working-set budget used for tile-size selection."""
    try:
        kind = jax.devices()[0].device_kind.lower()
    except Exception:
        kind = ""
    if "v7" in kind:
        return 20 << 20   # v7x: 64 MiB physical VMEM per TensorCore
    return 40 << 20       # v5e / v6e: 128 MiB physical VMEM


def cross_entropy_weighted_fg_v2(logs, yb_oh, weights_fg, mask=None, *,
                                 labels=None, max_rows_per_tile=None):
    """Scalar mean over N*H*W of weight[y] * CE(logs, y), masked per pixel."""
    assert isinstance(weights_fg, (list, tuple)), 'fg weights must be given as list'
    N, C, H, W = logs.shape
    HW = H * W
    P = N * HW

    # class weights: [2 - mean(weights_fg)] + weights_fg (static, from __init__)
    weight = [float(2.0 - np.mean(weights_fg))] + [float(w) for w in weights_fg]
    assert len(weight) == C

    # ---- label stream: argmax (+ mask fold) (+ int8 cast), one fused XLA pass
    if labels is None:
        assert yb_oh.shape == logs.shape
        labels = jnp.argmax(yb_oh, axis=1)                    # (N, H, W)
    labels = labels.astype(jnp.int32)
    if mask is not None:
        # Binary mask assumed: masked-out pixels become the sentinel class C.
        labels = jnp.where(mask[:, 0] != 0, labels, jnp.int32(C))
    lab_dtype = jnp.int8 if C < 127 else jnp.int32
    labels = labels.astype(lab_dtype).reshape(N, HW)

    # ---- tile selection (rows of 128 lanes) --------------------------------
    rows = pl.cdiv(HW, 128)
    logit_bytes = jnp.dtype(logs.dtype).itemsize
    lab_bytes = jnp.dtype(lab_dtype).itemsize
    # Per-row VMEM: double-buffered logits + labels + output, plus headroom for
    # the handful of live (R,128) f32 temporaries in the kernel body.
    bytes_per_row = 128 * (2 * C * logit_bytes + 2 * lab_bytes + 2 * 4 + 8 * 4)
    budget = _vmem_budget_bytes()
    cap = max(32, min(1024, (budget // bytes_per_row) // 32 * 32))
    if max_rows_per_tile is not None:
        cap = max(32, (min(cap, max_rows_per_tile) // 32) * 32)

    if rows <= cap:
        R = rows                     # full-extent block along the rows axis
    else:
        # Multiples of 32 (int8 sublane packing) in [256, cap]: prefer zero
        # padding, then the largest tile.
        lo = min(cap, 256)
        R, best_pad = None, None
        for r in range(lo, cap + 1, 32):
            pad_r = pl.cdiv(rows, r) * r - rows
            if best_pad is None or pad_r <= best_pad:
                R, best_pad = r, pad_r

    rows_pad = pl.cdiv(rows, R) * R
    HW_pad = rows_pad * 128
    num_tiles = rows_pad // R

    # ---- padding: label stream is cheap; logits only when unavoidable ------
    logs_flat = logs.reshape(N, C, HW)     # free contiguous reshape
    if HW_pad != HW:
        # Full HBM copy of the logits; only reached for awkward H*W shapes.
        logs_flat = jnp.pad(logs_flat, ((0, 0), (0, 0), (0, HW_pad - HW)))
        labels = jnp.pad(labels, ((0, 0), (0, HW_pad - HW)),
                         constant_values=C)   # sentinel -> contributes exactly 0

    logs4 = logs_flat.reshape(N, C, rows_pad, 128)
    lab3 = labels.reshape(N, rows_pad, 128)

    # ---- split the tile axis so both v7x TensorCores get work even at N == 1
    split = 2 if (num_tiles >= 2 and num_tiles % 2 == 0) else 1
    tiles_per_split = num_tiles // split

    vmem_need = R * bytes_per_row
    vmem_limit = int(max(32 << 20, min(vmem_need + (8 << 20), 56 << 20)))

    partials = pl.pallas_call(
        _make_kernel(weight),
        out_shape=jax.ShapeDtypeStruct((N, split, R, 128), jnp.float32),
        grid=(N, split, tiles_per_split),
        in_specs=[
            pl.BlockSpec((1, C, R, 128),
                         lambda n, p, t: (n, 0, p * tiles_per_split + t, 0)),
            pl.BlockSpec((1, R, 128),
                         lambda n, p, t: (n, p * tiles_per_split + t, 0)),
        ],
        out_specs=pl.BlockSpec((1, 1, R, 128), lambda n, p, t: (n, p, 0, 0)),
        compiler_params=pltpu.CompilerParams(
            dimension_semantics=("parallel", "parallel", "arbitrary"),
            vmem_limit_bytes=vmem_limit),
    )(logs4, lab3)

    # CrossEntropyLoss(reduction='none').mean() == sum / (N*H*W); sentinel /
    # padded pixels contribute exactly 0 to the sum.
    return jnp.sum(partials) / jnp.float32(P)


def _reference(logs, yb_oh, weights_fg, mask=None):
    weight = jnp.asarray([2.0 - float(np.mean(weights_fg))] + list(weights_fg),
                         dtype=jnp.float32)
    y = jnp.argmax(yb_oh, axis=1)                                  # (N, H, W)
    logp = jax.nn.log_softmax(logs.astype(jnp.float32), axis=1)    # (N, C, H, W)
    nll = -jnp.take_along_axis(logp, y[:, None], axis=1)[:, 0]     # (N, H, W)
    l = weight[y] * nll
    if mask is not None:
        l = l * mask[:, 0]
    return jnp.mean(l)


if __name__ == "__main__":
    key = jax.random.PRNGKey(0)
    keys = jax.random.split(key, 9)

    def _check(N, C, H, W, weights_fg, use_mask, ks, **kw):
        k1, k2, k3 = ks
        logs = jax.random.normal(k1, (N, C, H, W), dtype=jnp.float32)
        y = jax.random.randint(k2, (N, H, W), 0, C)
        yb_oh = jax.nn.one_hot(y, C, axis=1, dtype=jnp.float32)   # (N, C, H, W)
        mask = None
        if use_mask:
            mask = (jax.random.uniform(k3, (N, 1, H, W)) > 0.3).astype(jnp.float32)
        out = jax.block_until_ready(
            cross_entropy_weighted_fg_v2(logs, yb_oh, weights_fg, mask=mask, **kw))
        ref = jax.block_until_ready(_reference(logs, yb_oh, weights_fg, mask=mask))
        assert jnp.allclose(out, ref, atol=1e-5, rtol=1e-4), (out, ref)

    # 1) required small shape: batch=2, channels=4, spatial=16x16, with mask
    _check(2, 4, 16, 16, [1.5, 1.2, 0.8], True, keys[0:3])

    # 2) multi-tile + accumulation + parallel tile-split path (forces R=32,
    #    4 tiles -> 2 parallel halves x 2 accumulated steps), no mask
    _check(1, 4, 128, 128, [1.5, 1.2, 0.8], False, keys[3:6], max_rows_per_tile=32)

    # 3) H*W not a multiple of 128 -> padded logits + sentinel-padded labels
    _check(2, 3, 10, 30, [1.3, 0.7], True, keys[6:9])

    print("KERNEL_OK")
</pallas_src>

<mosaic_0001>
module attributes {stable_mosaic.version = 11 : i64} {
  func.func @kernel(%arg0: i32, %arg1: i32, %arg2: i32, %arg3: memref<1x4x2x128xf32, #tpu.memory_space<vmem>>, %arg4: memref<1x2x128xi8, #tpu.memory_space<vmem>>, %arg5: memref<1x1x2x128xf32, #tpu.memory_space<vmem>>) attributes {dimension_semantics = [#tpu.dimension_semantics<parallel>, #tpu.dimension_semantics<parallel>, #tpu.dimension_semantics<arbitrary>], iteration_bounds = array<i64: 2, 1, 1>, scalar_prefetch = 0 : i64, scratch_operands = 0 : i64, tpu.core_type = #tpu.core_type<tc>, window_params = [{transform_indices = @transform_0, window_bounds = array<i64: 1, 4, 2, 128>}, {transform_indices = @transform_1, window_bounds = array<i64: 1, 2, 128>}, {transform_indices = @transform_2, window_bounds = array<i64: 1, 1, 2, 128>}]} {
    %c0_i32 = arith.constant 0 : i32
    %0 = arith.cmpi eq, %arg2, %c0_i32 : i32
    %1 = arith.extui %0 : i1 to i32
    %c0_i32_0 = arith.constant 0 : i32
    %2 = arith.cmpi ne, %1, %c0_i32_0 : i32
    scf.if %2 {
      %cst_47 = arith.constant 0.000000e+00 : f32
      %70 = vector.broadcast %cst_47 : f32 to vector<1x1x2x128xf32>
      %c0_48 = arith.constant 0 : index
      %c0_49 = arith.constant 0 : index
      %c0_50 = arith.constant 0 : index
      %c0_51 = arith.constant 0 : index
      %71 = vector.load %arg5[%c0_48, %c0_49, %c0_50, %c0_51] : memref<1x1x2x128xf32, #tpu.memory_space<vmem>>, vector<1x1x2x128xf32>
      tpu.vector_store %arg5[%c0_48, %c0_49, %c0_50, %c0_51], %70 {strides = array<i32>} : memref<1x1x2x128xf32, #tpu.memory_space<vmem>>, vector<1x1x2x128xf32>,
    } else {
    }
    %c0 = arith.constant 0 : index
    %c0_1 = arith.constant 0 : index
    %c0_2 = arith.constant 0 : index
    %3 = vector.load %arg4[%c0, %c0_1, %c0_2] : memref<1x2x128xi8, #tpu.memory_space<vmem>>, vector<1x2x128xi8>
    %4 = vector.shape_cast %3 : vector<1x2x128xi8> to vector<2x128xi8>
    %5 = arith.extsi %4 : vector<2x128xi8> to vector<2x128xi32>
    %c0_3 = arith.constant 0 : index
    %c0_4 = arith.constant 0 : index
    %c0_5 = arith.constant 0 : index
    %c0_6 = arith.constant 0 : index
    %6 = vector.load %arg3[%c0_3, %c0_4, %c0_5, %c0_6] : memref<1x4x2x128xf32, #tpu.memory_space<vmem>>, vector<1x1x2x128xf32>
    %7 = vector.shape_cast %6 : vector<1x1x2x128xf32> to vector<2x128xf32>
    %c0_7 = arith.constant 0 : index
    %c1 = arith.constant 1 : index
    %c0_8 = arith.constant 0 : index
    %c0_9 = arith.constant 0 : index
    %8 = vector.load %arg3[%c0_7, %c1, %c0_8, %c0_9] : memref<1x4x2x128xf32, #tpu.memory_space<vmem>>, vector<1x1x2x128xf32>
    %9 = vector.shape_cast %8 : vector<1x1x2x128xf32> to vector<2x128xf32>
    %10 = arith.maximumf %7, %9 : vector<2x128xf32>
    %c0_10 = arith.constant 0 : index
    %c2 = arith.constant 2 : index
    %c0_11 = arith.constant 0 : index
    %c0_12 = arith.constant 0 : index
    %11 = vector.load %arg3[%c0_10, %c2, %c0_11, %c0_12] : memref<1x4x2x128xf32, #tpu.memory_space<vmem>>, vector<1x1x2x128xf32>
    %12 = vector.shape_cast %11 : vector<1x1x2x128xf32> to vector<2x128xf32>
    %13 = arith.maximumf %10, %12 : vector<2x128xf32>
    %c0_13 = arith.constant 0 : index
    %c3 = arith.constant 3 : index
    %c0_14 = arith.constant 0 : index
    %c0_15 = arith.constant 0 : index
    %14 = vector.load %arg3[%c0_13, %c3, %c0_14, %c0_15] : memref<1x4x2x128xf32, #tpu.memory_space<vmem>>, vector<1x1x2x128xf32>
    %15 = vector.shape_cast %14 : vector<1x1x2x128xf32> to vector<2x128xf32>
    %16 = arith.maximumf %13, %15 : vector<2x128xf32>
    %cst = arith.constant 0.000000e+00 : f32
    %17 = vector.broadcast %cst : f32 to vector<2x128xf32>
    %cst_16 = arith.constant 0.000000e+00 : f32
    %18 = vector.broadcast %cst_16 : f32 to vector<2x128xf32>
    %cst_17 = arith.constant 0.000000e+00 : f32
    %19 = vector.broadcast %cst_17 : f32 to vector<2x128xf32>
    %c0_18 = arith.constant 0 : index
    %c0_19 = arith.constant 0 : index
    %c0_20 = arith.constant 0 : index
    %c0_21 = arith.constant 0 : index
    %20 = vector.load %arg3[%c0_18, %c0_19, %c0_20, %c0_21] : memref<1x4x2x128xf32, #tpu.memory_space<vmem>>, vector<1x1x2x128xf32>
    %21 = vector.shape_cast %20 : vector<1x1x2x128xf32> to vector<2x128xf32>
    %22 = arith.subf %21, %16 : vector<2x128xf32>
    %23 = math.exp %22 : vector<2x128xf32>
    %24 = arith.addf %17, %23 : vector<2x128xf32>
    %c0_i32_22 = arith.constant 0 : i32
    %25 = vector.broadcast %c0_i32_22 : i32 to vector<2x128xi32>
    %26 = arith.cmpi eq, %5, %25 : vector<2x128xi32>
    %27 = arith.select %26, %21, %18 : vector<2x128xi1>, vector<2x128xf32>
    %cst_23 = arith.constant 0.833333313 : f32
    %28 = vector.broadcast %cst_23 : f32 to vector<2x128xf32>
    %29 = arith.select %26, %28, %19 : vector<2x128xi1>, vector<2x128xf32>
    %c0_24 = arith.constant 0 : index
    %c1_25 = arith.constant 1 : index
    %c0_26 = arith.constant 0 : index
    %c0_27 = arith.constant 0 : index
    %30 = vector.load %arg3[%c0_24, %c1_25, %c0_26, %c0_27] : memref<1x4x2x128xf32, #tpu.memory_space<vmem>>, vector<1x1x2x128xf32>
    %31 = vector.shape_cast %30 : vector<1x1x2x128xf32> to vector<2x128xf32>
    %32 = arith.subf %31, %16 : vector<2x128xf32>
    %33 = math.exp %32 : vector<2x128xf32>
    %34 = arith.addf %24, %33 : vector<2x128xf32>
    %c1_i32 = arith.constant 1 : i32
    %35 = vector.broadcast %c1_i32 : i32 to vector<2x128xi32>
    %36 = arith.cmpi eq, %5, %35 : vector<2x128xi32>
    %37 = arith.select %36, %31, %27 : vector<2x128xi1>, vector<2x128xf32>
    %cst_28 = arith.constant 1.500000e+00 : f32
    %38 = vector.broadcast %cst_28 : f32 to vector<2x128xf32>
    %39 = arith.select %36, %38, %29 : vector<2x128xi1>, vector<2x128xf32>
    %c0_29 = arith.constant 0 : index
    %c2_30 = arith.constant 2 : index
    %c0_31 = arith.constant 0 : index
    %c0_32 = arith.constant 0 : index
    %40 = vector.load %arg3[%c0_29, %c2_30, %c0_31, %c0_32] : memref<1x4x2x128xf32, #tpu.memory_space<vmem>>, vector<1x1x2x128xf32>
    %41 = vector.shape_cast %40 : vector<1x1x2x128xf32> to vector<2x128xf32>
    %42 = arith.subf %41, %16 : vector<2x128xf32>
    %43 = math.exp %42 : vector<2x128xf32>
    %44 = arith.addf %34, %43 : vector<2x128xf32>
    %c2_i32 = arith.constant 2 : i32
    %45 = vector.broadcast %c2_i32 : i32 to vector<2x128xi32>
    %46 = arith.cmpi eq, %5, %45 : vector<2x128xi32>
    %47 = arith.select %46, %41, %37 : vector<2x128xi1>, vector<2x128xf32>
    %cst_33 = arith.constant 1.200000e+00 : f32
    %48 = vector.broadcast %cst_33 : f32 to vector<2x128xf32>
    %49 = arith.select %46, %48, %39 : vector<2x128xi1>, vector<2x128xf32>
    %c0_34 = arith.constant 0 : index
    %c3_35 = arith.constant 3 : index
    %c0_36 = arith.constant 0 : index
    %c0_37 = arith.constant 0 : index
    %50 = vector.load %arg3[%c0_34, %c3_35, %c0_36, %c0_37] : memref<1x4x2x128xf32, #tpu.memory_space<vmem>>, vector<1x1x2x128xf32>
    %51 = vector.shape_cast %50 : vector<1x1x2x128xf32> to vector<2x128xf32>
    %52 = arith.subf %51, %16 : vector<2x128xf32>
    %53 = math.exp %52 : vector<2x128xf32>
    %54 = arith.addf %44, %53 : vector<2x128xf32>
    %c3_i32 = arith.constant 3 : i32
    %55 = vector.broadcast %c3_i32 : i32 to vector<2x128xi32>
    %56 = arith.cmpi eq, %5, %55 : vector<2x128xi32>
    %57 = arith.select %56, %51, %47 : vector<2x128xi1>, vector<2x128xf32>
    %cst_38 = arith.constant 8.000000e-01 : f32
    %58 = vector.broadcast %cst_38 : f32 to vector<2x128xf32>
    %59 = arith.select %56, %58, %49 : vector<2x128xi1>, vector<2x128xf32>
    %60 = math.log %54 : vector<2x128xf32>
    %61 = arith.addf %60, %16 : vector<2x128xf32>
    %c0_39 = arith.constant 0 : index
    %c0_40 = arith.constant 0 : index
    %c0_41 = arith.constant 0 : index
    %c0_42 = arith.constant 0 : index
    %62 = vector.load %arg5[%c0_39, %c0_40, %c0_41, %c0_42] : memref<1x1x2x128xf32, #tpu.memory_space<vmem>>, vector<1x1x2x128xf32>
    %63 = vector.shape_cast %62 : vector<1x1x2x128xf32> to vector<2x128xf32>
    %64 = arith.subf %61, %57 : vector<2x128xf32>
    %65 = arith.mulf %59, %64 : vector<2x128xf32>
    %66 = arith.addf %63, %65 : vector<2x128xf32>
    %c0_43 = arith.constant 0 : index
    %c0_44 = arith.constant 0 : index
    %c0_45 = arith.constant 0 : index
    %c0_46 = arith.constant 0 : index
    %67 = vector.load %arg5[%c0_43, %c0_44, %c0_45, %c0_46] : memref<1x1x2x128xf32, #tpu.memory_space<vmem>>, vector<1x1x2x128xf32>
    %68 = vector.shape_cast %67 : vector<1x1x2x128xf32> to vector<2x128xf32>
    %69 = vector.shape_cast %66 : vector<2x128xf32> to vector<1x1x2x128xf32>
    tpu.vector_store %arg5[%c0_43, %c0_44, %c0_45, %c0_46], %69 {strides = array<i32>} : memref<1x1x2x128xf32, #tpu.memory_space<vmem>>, vector<1x1x2x128xf32>,
    return
  }
  func.func @transform_0(%arg0: i32, %arg1: i32, %arg2: i32) -> (i32, i32, i32, i32) {
    %c1_i32 = arith.constant 1 : i32
    %0 = arith.muli %arg1, %c1_i32 : i32
    %1 = arith.addi %0, %arg2 : i32
    %c0_i32 = arith.constant 0 : i32
    %c0_i32_0 = arith.constant 0 : i32
    %c0_i32_1 = arith.constant 0 : i32
    return %arg0, %c0_i32, %1, %c0_i32_0 : i32, i32, i32, i32
  }
  func.func @transform_1(%arg0: i32, %arg1: i32, %arg2: i32) -> (i32, i32, i32) {
    %c1_i32 = arith.constant 1 : i32
    %0 = arith.muli %arg1, %c1_i32 : i32
    %1 = arith.addi %0, %arg2 : i32
    %c0_i32 = arith.constant 0 : i32
    %c0_i32_0 = arith.constant 0 : i32
    return %arg0, %1, %c0_i32 : i32, i32, i32
  }
  func.func @transform_2(%arg0: i32, %arg1: i32, %arg2: i32) -> (i32, i32, i32, i32) {
    %c0_i32 = arith.constant 0 : i32
    %c0_i32_0 = arith.constant 0 : i32
    %c0_i32_1 = arith.constant 0 : i32
    return %arg0, %arg1, %c0_i32, %c0_i32_0 : i32, i32, i32, i32
  }
}

</mosaic_0001>

<llo_original>
// kernel: tpu_custom_call.1
$region0: #{tpu_custom_call.1}
  #allocation0 [shape = 'u32[]', space=smem, size = 0x4, offset = 0x4, fixed_abs, tag = 'smem constant byte address 0x4 - core index']
  #allocation1 [shape = 'u32[144,128]{1,0:T(1,128)}', space=vmem, size = 0x12000, scoped, tag = 'internal scratch']
  %s0 = inlined_call_operand.hbm [shape: f32[2,4,2,128], index: 0, kind: input, shape index: {}]
  %s1 = inlined_call_operand.hbm [shape: s8[2,2,128], index: 1, kind: input, shape index: {}]
  %s2 = inlined_call_operand.hbm [shape: f32[2,1,2,128], index: 2, kind: output, shape index: {}]
  %s3 = sld [smem:[#allocation0]]
  $region53: #{tpu_custom_call.1} parent=0
    _
  %s5 = ssub.s32 1, %s3
  %s6 = scalar_select 0, %s5, %s3
  $region1: #{tpu_custom_call.1} parent=0
    #allocation2 [shape = 'u8[8192]{0}', space=vmem, size = 0x2000, scoped, tag = 'input window, operand 0']
    #allocation3 [shape = 's32[2]{0}', space=sflag, size = 0x8, scoped, tag = 'scoped memory for tpu_custom_call.1']
    #allocation4 [shape = 's32[2]{0}', space=sflag, size = 0x8, scoped, tag = 'scoped memory for tpu_custom_call.1']
    #allocation5 [shape = 'u8[1024]{0}', space=vmem, size = 0x400, scoped, tag = 'input window, operand 1']
    #allocation6 [shape = 's32[2]{0}', space=sflag, size = 0x8, scoped, tag = 'scoped memory for tpu_custom_call.1']
    #allocation7 [shape = 'u8[2048]{0}', space=vmem, size = 0x800, scoped, tag = 'output window, operand 0']
    %7 = vsyncpa [#allocation3], 0
    %s8 = scalar_lea.sflag [#allocation3], 1
    %9 = vsyncpa %s8, 0
    %10 = vsyncpa [#allocation6], 0
    %s11 = scalar_lea.sflag [#allocation6], 1
    %12 = vsyncpa %s11, 0
    %13 = vsyncpa [#allocation4], 0
    %s14 = scalar_lea.sflag [#allocation4], 1
    %15 = vsyncpa %s14, 0
    loop: start=0, step=1, limit=4
    $region2: #{tpu_custom_call.1} parent=1 // loop_pre_header
      _
    $region3: #{tpu_custom_call.1} parent=1 // loop_header
      %s17 = sphi 0, %s21
      %p18 = scmp.ge.s32.totalorder %s17, 4
      %s24 = sphi 0, %s43
      %s25 = sphi 0, %s39
      %s26 = sphi 0, %s35
      %s27 = sphi 0, %s24
      %s28 = sphi 0, %s25
      %s29 = sphi 0, %s26
      %s30 = sphi 0, %s27
      %s31 = sphi 0, %s28
      %s32 = sphi 0, %s29
      %s50 = sphi 0, %s52
      %s53 = sphi 0, %s50
      %s54 = sphi 0, %s53
      %s70 = sphi 0, %s54
      %s80 = sphi 0, %s82
      %s83 = sphi 0, %s80
      %s84 = sphi 0, %s83
      %s100 = sphi 0, %s84
      %s108 = sphi 0, %s110
      %s111 = sphi 0, %s108
      %s112 = sphi 0, %s111
      %s128 = sphi 0, %s112
    $region4: #{tpu_custom_call.1} parent=1 // loop_header_branch
      %20 = sbr.rel (%p18) target = $region8
    $region5: #{tpu_custom_call.1} parent=1 // loop_body
      %s22 = ssub.s32 %s17, 1
      %s23 = ssub.s32 %s17, 2
      %s33 = sadd.s32 1, %s26
      %p34 = scmp.ge.s32.totalorder %s33, 1
      %s35 = scalar_select %p34, 0, %s33
      %s36 = sadd.s32 1, %s25
      %s37 = scalar_select %p34, %s36, %s25
      %p38 = scmp.ge.s32.totalorder %s37, 1
      %s39 = scalar_select %p38, 0, %s37
      %s40 = sadd.s32 1, %s24
      %s41 = scalar_select %p38, %s40, %s24
      %p42 = scmp.ge.s32.totalorder %s41, 2
      %s43 = scalar_select %p42, 0, %s41
      %s44 = sadd.s32 %s25, %s26
      %s45 = sadd.s32 %s39, %s35
      %s46 = ssub.s32 %s24, %s43
      %s47 = ssub.s32 %s44, %s45
      %s48 = sor.u32 %s46, %s47
      %p49 = scmp.eq.s32.totalorder %s48, 0
      %s51 = sadd.s32 %s50, 1
      %s52 = scalar_select %p49, %s50, %s51
      %p55 = pneg %p49
      %p56 = scmp.eq.s32.totalorder %s17, 1
      %p57 = por %p55, %p56
      %p58 = scmp.ne.s32.totalorder %s50, %s53
      %p59 = scmp.eq.s32.totalorder %s17, 0
      %p60 = por %p58, %p59
      %p61 = scmp.ne.s32.totalorder %s50, %s53
      %p62 = scmp.eq.s32.totalorder %s22, 1
      %p63 = por %p61, %p62
      %p64 = scmp.ne.s32.totalorder %s53, %s54
      %p65 = scmp.eq.s32.totalorder %s22, 0
      %p66 = por %p64, %p65
      %p67 = scmp.ne.s32.totalorder %s53, %s54
      %p68 = scmp.eq.s32.totalorder %s23, 1
      %p69 = por %p67, %p68
      %p71 = scmp.ne.s32.totalorder %s54, %s70
      %p72 = scmp.eq.s32.totalorder %s23, 0
      %p73 = por %p71, %p72
      %s74 = sadd.s32 %s25, %s26
      %s75 = sadd.s32 %s39, %s35
      %s76 = ssub.s32 %s24, %s43
      %s77 = ssub.s32 %s74, %s75
      %s78 = sor.u32 %s76, %s77
      %p79 = scmp.eq.s32.totalorder %s78, 0
      %s81 = sadd.s32 %s80, 1
      %s82 = scalar_select %p79, %s80, %s81
      %p85 = pneg %p79
      %p86 = scmp.eq.s32.totalorder %s17, 1
      %p87 = por %p85, %p86
      %p88 = scmp.ne.s32.totalorder %s80, %s83
      %p89 = scmp.eq.s32.totalorder %s17, 0
      %p90 = por %p88, %p89
      %p91 = scmp.ne.s32.totalorder %s80, %s83
      %p92 = scmp.eq.s32.totalorder %s22, 1
      %p93 = por %p91, %p92
      %p94 = scmp.ne.s32.totalorder %s83, %s84
      %p95 = scmp.eq.s32.totalorder %s22, 0
      %p96 = por %p94, %p95
      %p97 = scmp.ne.s32.totalorder %s83, %s84
      %p98 = scmp.eq.s32.totalorder %s23, 1
      %p99 = por %p97, %p98
      %p101 = scmp.ne.s32.totalorder %s84, %s100
      %p102 = scmp.eq.s32.totalorder %s23, 0
      %p103 = por %p101, %p102
      %s104 = ssub.s32 %s24, %s43
      %s105 = ssub.s32 %s25, %s39
      %s106 = sor.u32 %s104, %s105
      %p107 = scmp.eq.s32.totalorder %s106, 0
      %s109 = sadd.s32 %s108, 1
      %s110 = scalar_select %p107, %s108, %s109
      %p113 = pneg %p107
      %p114 = scmp.eq.s32.totalorder %s17, 1
      %p115 = por %p113, %p114
      %p116 = scmp.ne.s32.totalorder %s108, %s111
      %p117 = scmp.eq.s32.totalorder %s17, 0
      %p118 = por %p116, %p117
      %p119 = scmp.ne.s32.totalorder %s108, %s111
      %p120 = scmp.eq.s32.totalorder %s22, 1
      %p121 = por %p119, %p120
      %p122 = scmp.ne.s32.totalorder %s111, %s112
      %p123 = scmp.eq.s32.totalorder %s22, 0
      %p124 = por %p122, %p123
      %p125 = scmp.ne.s32.totalorder %s111, %s112
      %p126 = scmp.eq.s32.totalorder %s23, 1
      %p127 = por %p125, %p126
      %p129 = scmp.ne.s32.totalorder %s112, %s128
      %p130 = scmp.eq.s32.totalorder %s23, 0
      %p131 = por %p129, %p130
      %p132 = scmp.le.s32.totalorder 1, %s17
      %p133 = scmp.lt.s32.totalorder %s17, 3
      %p134 = pnand %p132, %p133
      %p135 = pneg %p134
      // Predicated region
      $region9: #{tpu_custom_call.1} parent=5 // pred_check
        _
      $region10: #{tpu_custom_call.1} parent=5 // pred_check_branch
        %137 = sbr.rel (%p134) target = $region12
      $region11: #{tpu_custom_call.1} parent=5 // pred_region
        %s138 = ssub.s32 %s17, 1
      $region12: #{tpu_custom_call.1} parent=5 // pred_fallthru
        _
      %p139 = scmp.lt.s32.totalorder %s17, 2
      // Predicated region
      $region13: #{tpu_custom_call.1} parent=5 // pred_check
        %p140 = pneg %p139
      $region14: #{tpu_custom_call.1} parent=5 // pred_check_branch
        %142 = sbr.rel (%p140) target = $region16
      $region15: #{tpu_custom_call.1} parent=5 // pred_region
        // Predicated region
        $region17: #{tpu_custom_call.1} parent=15 // pred_check
          %p143 = pneg %p60
        $region18: #{tpu_custom_call.1} parent=15 // pred_check_branch
          %145 = sbr.rel (%p143) target = $region20
        $region19: #{tpu_custom_call.1} parent=15 // pred_region
          %s146 = sand.u32 %s50, 1
          %s147 = scalar_lea.sflag [#allocation3], %s146
          %s148 = sand.u32 %s50, 1
          %s149 = smul.addr %s148, 8
          %s150 = scalar_lea.vmem [#allocation2], %s149
          %s151 = sadd.s32 %s25, %s26
          %s153 = ssub.s32 128, 128
          %154 = vsyncadd %s147, %s153
          %s155 = smul.addr %s24, 4
          %s156 = sadd.s32 %s151, %s155
          %s157 = smul.addr %s156, 32
          %s158 = scalar_lea.hbm %s0, %s157
          %s159 = sshll.u32 %s150, 4
          %s160 = int_to_ptr.vmem [resolvable:$true] %s159
          %165 = dma.hbm_to_vmem [thread:$0]  %s158, 128, %s160, %s147, 32, 32, 2
        $region20: #{tpu_custom_call.1} parent=15 // pred_fallthru
          _
        // Predicated region
        $region21: #{tpu_custom_call.1} parent=15 // pred_check
          %p166 = pneg %p90
        $region22: #{tpu_custom_call.1} parent=15 // pred_check_branch
          %168 = sbr.rel (%p166) target = $region24
        $region23: #{tpu_custom_call.1} parent=15 // pred_region
          %s169 = sand.u32 %s80, 1
          %s170 = scalar_lea.sflag [#allocation6], %s169
          %s171 = sand.u32 %s80, 1
          %s172 = scalar_lea.vmem [#allocation5], %s171
          %s173 = sadd.s32 %s25, %s26
          %s175 = ssub.s32 16, 16
          %176 = vsyncadd %s170, %s175
          %s177 = sadd.s32 %s173, %s24
          %s178 = smul.addr %s177, 16
          %s179 = scalar_lea.hbm %s1, %s178
          %s181 = sshll.u32 %s172, 4
          %s182 = int_to_ptr.vmem [resolvable:$true] %s181
          %184 = dma.hbm_to_vmem [thread:$0]  %s179, 16, %s182, %s170
        $region24: #{tpu_custom_call.1} parent=15 // pred_fallthru
          _
      $region16: #{tpu_custom_call.1} parent=5 // pred_fallthru
        _
      %p185 = scmp.le.s32.totalorder 1, %s17
      %p186 = scmp.lt.s32.totalorder %s17, 3
      %p187 = pnand %p185, %p186
      %p188 = pneg %p187
      // Predicated region
      $region25: #{tpu_custom_call.1} parent=5 // pred_check
        _
      $region26: #{tpu_custom_call.1} parent=5 // pred_check_branch
        %190 = sbr.rel (%p187) target = $region28
      $region27: #{tpu_custom_call.1} parent=5 // pred_region
        %s191 = ssub.s32 %s17, 1
        %s192 = sand.u32 %s53, 1
        %s193 = scalar_lea.sflag [#allocation3], %s192
        %s194 = sand.u32 %s53, 1
        %s195 = smul.addr %s194, 8
        %s196 = scalar_lea.vmem [#allocation2], %s195
        // Predicated region
        $region29: #{tpu_custom_call.1} parent=27 // pred_check
          %p197 = pneg %p66
        $region30: #{tpu_custom_call.1} parent=27 // pred_check_branch
          %199 = sbr.rel (%p197) target = $region32
        $region31: #{tpu_custom_call.1} parent=27 // pred_region
          %200 = dma.done %s193, 128
        $region32: #{tpu_custom_call.1} parent=27 // pred_fallthru
          _
        %s201 = sand.u32 %s83, 1
        %s202 = scalar_lea.sflag [#allocation6], %s201
        %s203 = sand.u32 %s83, 1
        %s204 = scalar_lea.vmem [#allocation5], %s203
        // Predicated region
        $region33: #{tpu_custom_call.1} parent=27 // pred_check
          %p205 = pneg %p96
        $region34: #{tpu_custom_call.1} parent=27 // pred_check_branch
          %207 = sbr.rel (%p205) target = $region36
        $region35: #{tpu_custom_call.1} parent=27 // pred_region
          %208 = dma.done %s202, 16
        $region36: #{tpu_custom_call.1} parent=27 // pred_fallthru
          _
        %s209 = sand.u32 %s53, 1
        %s210 = scalar_lea.sflag [#allocation3], %s209
        %s211 = sand.u32 %s53, 1
        %s212 = smul.addr %s211, 8
        %s213 = scalar_lea.vmem [#allocation2], %s212
        %p214 = pneg %p66
        %p215 = pneg %p63
        %s216 = sand.u32 %s83, 1
        %s217 = scalar_lea.sflag [#allocation6], %s216
        %s218 = sand.u32 %s83, 1
        %s219 = scalar_lea.vmem [#allocation5], %s218
        %p220 = pneg %p96
        %p221 = pneg %p93
        %p222 = pneg %p124
        %p223 = pneg %p121
        %s224 = sand.u32 %s111, 1
        %s225 = scalar_lea.sflag [#allocation4], %s224
        %s226 = sand.u32 %s111, 1
        %s227 = smul.addr %s226, 2
        %s228 = scalar_lea.vmem [#allocation7], %s227
        %s229 = sadd.s32 %s28, %s29
        %s230 = sadd.s32 %s28, %s29
        %p231 = scmp.eq.s32.totalorder %s29, 0
        // Predicated region
        $region37: #{tpu_custom_call.1} parent=27 // pred_check
          %p232 = pneg %p231
        $region38: #{tpu_custom_call.1} parent=27 // pred_check_branch
          %234 = sbr.rel (%p232) target = $region40
        $region39: #{tpu_custom_call.1} parent=27 // pred_region
          %235 = vst [vmem:[%s228] sm:$0x3] 0.0
        $region40: #{tpu_custom_call.1} parent=27 // pred_fallthru
          _
        %v236 = vld [vmem:[%s204] sm:$0x1]
        %v237 = vunpack.c.0.s8 %v236
        %v238 = vld [vmem:[%s196] sm:$0x3]
        %s239 = scalar_lea.vmem %s196, 2 [#allocation2]
        %v240 = vld [vmem:[%s239] sm:$0x3]
        %v241 = vmax.f32 %v238, %v240
        %s242 = scalar_lea.vmem %s196, 4 [#allocation2]
        %v243 = vld [vmem:[%s242] sm:$0x3]
        %v244 = vmax.f32 %v241, %v243
        %s245 = scalar_lea.vmem %s196, 6 [#allocation2]
        %v246 = vld [vmem:[%s245] sm:$0x3]
        %v247 = vmax.f32 %v244, %v246
        %v248 = vsub.f32 %v238, %v247
        %v249 = vmul.f32 %v248, 1.442695
        %v250 = vpow.pop %v249
        %v251 = vadd.f32 %v250, 0.0
        %vm252 = vcmp.eq.s32.totalorder %v237, 0
        %v253 = vsel %vm252, %v238, 0.0
        %v254 = vsel %vm252, 0.8333333, 0.0
        %v255 = vsub.f32 %v240, %v247
        %v256 = vmul.f32 %v255, 1.442695
        %v257 = vpow.pop %v256
        %v258 = vadd.f32 %v251, %v257
        %vm259 = vcmp.eq.s32.totalorder %v237, 1
        %v260 = vsel %vm259, %v240, %v253
        %v261 = vsel %vm259, 1.5, %v254
        %v262 = vsub.f32 %v243, %v247
        %v263 = vmul.f32 %v262, 1.442695
        %v264 = vpow.pop %v263
        %v265 = vadd.f32 %v258, %v264
        %vm266 = vcmp.eq.s32.totalorder %v237, 2
        %v267 = vsel %vm266, %v243, %v260
        %v268 = vsel %vm266, 1.2, %v261
        %v269 = vsub.f32 %v246, %v247
        %v270 = vmul.f32 %v269, 1.442695
        %v271 = vpow.pop %v270
        %v272 = vadd.f32 %v265, %v271
        %vm273 = vcmp.eq.s32.totalorder %v237, 3
        %v274 = vsel %vm273, %v246, %v267
        %v275 = vsel %vm273, 0.8, %v268
        %v276 = vlog2.pop %v272
        %v277 = vmul.f32 %v276, 0.6931472
        %v278 = vadd.f32 %v277, %v247
        %v279 = vld [vmem:[%s228] sm:$0x3]
        %v280 = vsub.f32 %v278, %v274
        %v281 = vmul.f32 %v275, %v280
        %v282 = vadd.f32 %v279, %v281
        %283 = vst [vmem:[%s228] sm:$0x3] %v282
        %s284 = sand.u32 %s111, 1
        %s285 = scalar_lea.sflag [#allocation4], %s284
        %s286 = sand.u32 %s111, 1
        %s287 = smul.addr %s286, 2
        %s288 = scalar_lea.vmem [#allocation7], %s287
        // Predicated region
        $region41: #{tpu_custom_call.1} parent=27 // pred_check
          %p289 = pneg %p121
        $region42: #{tpu_custom_call.1} parent=27 // pred_check_branch
          %291 = sbr.rel (%p289) target = $region44
        $region43: #{tpu_custom_call.1} parent=27 // pred_region
          %s293 = ssub.s32 32, 32
          %294 = vsyncadd %s285, %s293
          %s295 = sadd.s32 %s28, %s27
          %s296 = smul.addr %s295, 32
          %s297 = scalar_lea.hbm %s2, %s296
          %s299 = sshll.u32 %s288, 4
          %s300 = int_to_ptr.vmem [resolvable:$true] %s299
          %302 = dma.vmem_to_hbm [thread:$0]  %s300, 32, %s297, %s285
        $region44: #{tpu_custom_call.1} parent=27 // pred_fallthru
          _
      $region28: #{tpu_custom_call.1} parent=5 // pred_fallthru
        _
      %p303 = scmp.le.s32.totalorder 2, %s17
      // Predicated region
      $region45: #{tpu_custom_call.1} parent=5 // pred_check
        %p304 = pneg %p303
      $region46: #{tpu_custom_call.1} parent=5 // pred_check_branch
        %306 = sbr.rel (%p304) target = $region48
      $region47: #{tpu_custom_call.1} parent=5 // pred_region
        %s307 = ssub.s32 %s17, 2
        // Predicated region
        $region49: #{tpu_custom_call.1} parent=47 // pred_check
          %p308 = pneg %p127
        $region50: #{tpu_custom_call.1} parent=47 // pred_check_branch
          %310 = sbr.rel (%p308) target = $region52
        $region51: #{tpu_custom_call.1} parent=47 // pred_region
          %s311 = sand.u32 %s112, 1
          %s312 = scalar_lea.sflag [#allocation4], %s311
          %s313 = sand.u32 %s112, 1
          %s314 = smul.addr %s313, 2
          %s315 = scalar_lea.vmem [#allocation7], %s314
          %316 = dma.done %s312, 32
        $region52: #{tpu_custom_call.1} parent=47 // pred_fallthru
          _
      $region48: #{tpu_custom_call.1} parent=5 // pred_fallthru
        _
    $region6: #{tpu_custom_call.1} parent=1 // loop_footer
      %s21 = sadd.s32 1, %s17
    $region7: #{tpu_custom_call.1} parent=1 // loop_footer_branch
      %16 = sbr.rel target = $region3
    $region8: #{tpu_custom_call.1} parent=1 // loop_exit
      _
    %317 = vsyncpa [#allocation3], 1
    %s318 = scalar_lea.sflag [#allocation3], 1
    %319 = vsyncpa %s318, 1
    %320 = vsyncpa [#allocation6], 1
    %s321 = scalar_lea.sflag [#allocation6], 1
    %322 = vsyncpa %s321, 1
    %323 = vsyncpa [#allocation4], 1
    %s324 = scalar_lea.sflag [#allocation4], 1
    %325 = vsyncpa %s324, 1

</llo_original>
